<compile_context>
chip_gen: v7x
topology: tpu7x:2x2x1
jax: 0.10.0
libtpu: 0.0.40
codegen_flags: <defaults>
</compile_context>

<pallas_src>
import jax
import jax.numpy as jnp
from jax.experimental import pallas as pl
from jax.experimental.pallas import tpu as pltpu

STATE_DIM = 7
ACTION_DIM = 1
HEAD_DIM = 2 * ACTION_DIM          # fused [mean | log_std]
H1, H2, H3 = 512, 256, 64
LOG_STD_MIN = -20.0
LOG_STD_MAX = 2.0

MAX_TB = 2048                      # tile cap: VMEM headroom on v7x / v5e
MEGACORE_MIN_B = 128               # above this, force >=2 grid steps (v7x TCs)


def _round_up(x, m):
    return (x + m - 1) // m * m


def actor_kernel(state_ref,
                 w1_ref, b1_ref,
                 w2_ref, b2_ref,
                 w3_ref, b3_ref,
                 wh_ref, bh_ref,
                 out_ref):
    # State tile arrives as (TB, 7) f32; cast to bf16 in-kernel (cheap VPU op,
    # avoids a wrapper-side HBM pad/cast pass).
    x = state_ref[...].astype(jnp.bfloat16)

    # One fused expression per layer: dot (MXU, f32 accumulate) + bias + ReLU
    # + bf16 cast, so only the bf16 activation is materialized between layers.
    h = jnp.maximum(
        jnp.dot(x, w1_ref[...], preferred_element_type=jnp.float32)
        + b1_ref[...], 0.0).astype(jnp.bfloat16)
    h = jnp.maximum(
        jnp.dot(h, w2_ref[...], preferred_element_type=jnp.float32)
        + b2_ref[...], 0.0).astype(jnp.bfloat16)
    h = jnp.maximum(
        jnp.dot(h, w3_ref[...], preferred_element_type=jnp.float32)
        + b3_ref[...], 0.0).astype(jnp.bfloat16)

    # Fused heads: (TB, 64) @ (64, 2); column 0 = mean, column 1 = log_std.
    head = jnp.dot(h, wh_ref[...], preferred_element_type=jnp.float32) + bh_ref[...]
    col = jax.lax.broadcasted_iota(jnp.int32, head.shape, 1)
    out_ref[...] = jnp.where(col >= ACTION_DIM,
                             jnp.clip(head, LOG_STD_MIN, LOG_STD_MAX),
                             head)


def make_actor_params(key):
    """Deterministic parameter init (uniform fan-in style, like nn.Linear)."""
    dims = [(STATE_DIM, H1), (H1, H2), (H2, H3),
            (H3, ACTION_DIM), (H3, ACTION_DIM)]
    params = []
    for i, (fan_in, fan_out) in enumerate(dims):
        kw, kb, key = jax.random.split(jax.random.fold_in(key, i), 3)
        bound = 1.0 / jnp.sqrt(float(fan_in))
        w = jax.random.uniform(kw, (fan_in, fan_out), jnp.float32, -bound, bound)
        b = jax.random.uniform(kb, (1, fan_out), jnp.float32, -bound, bound)
        params.append((w, b))
    return params  # [(w1,b1),(w2,b2),(w3,b3),(wm,bm),(wl,bl)]


def actor_forward(state, params, tb=MAX_TB):
    """state: (B, STATE_DIM) f32 -> (mean, log_std), each (B, ACTION_DIM) f32."""
    (w1, b1), (w2, b2), (w3, b3), (wm, bm), (wl, bl) = params
    B = state.shape[0]

    # Balanced batch tiling (bounds padding waste to <8 rows per tile), with a
    # cap at MAX_TB and a forced split into >=2 tiles for moderate/large B so
    # the "parallel" batch axis can use both TensorCores on v7x.
    tb = min(tb, MAX_TB)
    min_tiles = 2 if B >= MEGACORE_MIN_B else 1
    num_tiles = max(pl.cdiv(B, tb), min_tiles)
    tb_eff = _round_up(pl.cdiv(B, num_tiles), 8)
    num_tiles = pl.cdiv(B, tb_eff)
    b_pad = num_tiles * tb_eff

    # Batch pad only when needed (feature dim stays at 7; no dtype change).
    state_p = state if b_pad == B else jnp.pad(state, ((0, b_pad - B), (0, 0)))

    # Weights in bf16 (small, one-time casts); biases stay f32 for accumulate.
    w1_b = w1.astype(jnp.bfloat16)
    w2_b = w2.astype(jnp.bfloat16)
    w3_b = w3.astype(jnp.bfloat16)
    wh = jnp.concatenate([wm, wl], axis=1).astype(jnp.bfloat16)   # (64, 2)
    b1_f = b1.astype(jnp.float32)
    b2_f = b2.astype(jnp.float32)
    b3_f = b3.astype(jnp.float32)
    bh = jnp.concatenate([bm, bl], axis=1).astype(jnp.float32)    # (1, 2)

    grid = (num_tiles,)

    weight_bytes = (w1_b.size + w2_b.size + w3_b.size + wh.size) * 2 \
                   + (b1_f.size + b2_f.size + b3_f.size + bh.size) * 4
    flops = 2 * b_pad * (STATE_DIM * H1 + H1 * H2 + H2 * H3 + H3 * HEAD_DIM)
    bytes_accessed = b_pad * STATE_DIM * 4 + b_pad * HEAD_DIM * 4 + weight_bytes

    def resident(shape):
        # Full-shape block, same index every grid step -> DMA'd once, stays in VMEM.
        return pl.BlockSpec(shape, lambda i: (0, 0))

    out = pl.pallas_call(
        actor_kernel,
        out_shape=jax.ShapeDtypeStruct((b_pad, HEAD_DIM), jnp.float32),
        grid=grid,
        in_specs=[
            pl.BlockSpec((tb_eff, STATE_DIM), lambda i: (i, 0)),
            resident((STATE_DIM, H1)), resident((1, H1)),
            resident((H1, H2)), resident((1, H2)),
            resident((H2, H3)), resident((1, H3)),
            resident((H3, HEAD_DIM)), resident((1, HEAD_DIM)),
        ],
        out_specs=pl.BlockSpec((tb_eff, HEAD_DIM), lambda i: (i, 0)),
        compiler_params=pltpu.CompilerParams(
            dimension_semantics=("parallel",),
            vmem_limit_bytes=32 * 1024 * 1024),
        cost_estimate=pl.CostEstimate(
            flops=flops, transcendentals=0, bytes_accessed=bytes_accessed),
    )(state_p, w1_b, b1_f, w2_b, b2_f, w3_b, b3_f, wh, bh)

    mean = out[:B, :ACTION_DIM]
    log_std = out[:B, ACTION_DIM:]
    return mean, log_std


def actor_forward_ref(state, params):
    """Plain-JAX f32 reference for correctness check."""
    (w1, b1), (w2, b2), (w3, b3), (wm, bm), (wl, bl) = params
    h = jnp.maximum(state @ w1 + b1, 0.0)
    h = jnp.maximum(h @ w2 + b2, 0.0)
    h = jnp.maximum(h @ w3 + b3, 0.0)
    mean = h @ wm + bm
    log_std = jnp.clip(h @ wl + bl, LOG_STD_MIN, LOG_STD_MAX)
    return mean, log_std


def _check(state, params, **kw):
    mean, log_std = actor_forward(state, params, **kw)
    jax.block_until_ready((mean, log_std))
    mean_ref, log_std_ref = actor_forward_ref(state, params)
    B = state.shape[0]
    assert mean.shape == (B, ACTION_DIM) and log_std.shape == (B, ACTION_DIM)
    # bf16 matmuls with f32 accumulate -> loose-ish tolerance vs f32 reference.
    assert jnp.allclose(mean, mean_ref, atol=3e-2, rtol=3e-2)
    assert jnp.allclose(log_std, log_std_ref, atol=3e-2, rtol=3e-2)


if __name__ == "__main__":
    key = jax.random.PRNGKey(0)
    k_state, k_params = jax.random.split(key)
    params = make_actor_params(k_params)

    # Case 1: tiny batch -> single grid step, tile shrunk to batch.
    state = jax.random.normal(k_state, (8, STATE_DIM), jnp.float32)
    _check(state, params)

    # Case 2: multi-step grid + batch padding path (B=20, tb=8 -> grid=(3,)).
    state2 = jax.random.normal(jax.random.fold_in(k_state, 1),
                               (20, STATE_DIM), jnp.float32)
    _check(state2, params, tb=8)

    # Case 3: forced >=2-tile (megacore) balanced-tiling path (B=300 -> 2 tiles).
    state3 = jax.random.normal(jax.random.fold_in(k_state, 2),
                               (300, STATE_DIM), jnp.float32)
    _check(state3, params)

    print("KERNEL_OK")
</pallas_src>

<mosaic_0001>
module attributes {stable_mosaic.version = 11 : i64} {
  func.func @actor_kernel(%arg0: i32, %arg1: memref<8x7xf32, #tpu.memory_space<vmem>>, %arg2: memref<7x512xbf16, #tpu.memory_space<vmem>>, %arg3: memref<1x512xf32, #tpu.memory_space<vmem>>, %arg4: memref<512x256xbf16, #tpu.memory_space<vmem>>, %arg5: memref<1x256xf32, #tpu.memory_space<vmem>>, %arg6: memref<256x64xbf16, #tpu.memory_space<vmem>>, %arg7: memref<1x64xf32, #tpu.memory_space<vmem>>, %arg8: memref<64x2xbf16, #tpu.memory_space<vmem>>, %arg9: memref<1x2xf32, #tpu.memory_space<vmem>>, %arg10: memref<8x2xf32, #tpu.memory_space<vmem>>) attributes {dimension_semantics = [#tpu.dimension_semantics<parallel>], iteration_bounds = array<i64: 1>, scalar_prefetch = 0 : i64, scratch_operands = 0 : i64, tpu.core_type = #tpu.core_type<tc>, window_params = [{transform_indices = @transform_0, window_bounds = array<i64: 8, 7>}, {pipeline_mode = #tpu.pipeline_mode<synchronous>, transform_indices = @transform_1, window_bounds = array<i64: 7, 512>}, {pipeline_mode = #tpu.pipeline_mode<synchronous>, transform_indices = @transform_2, window_bounds = array<i64: 1, 512>}, {pipeline_mode = #tpu.pipeline_mode<synchronous>, transform_indices = @transform_3, window_bounds = array<i64: 512, 256>}, {pipeline_mode = #tpu.pipeline_mode<synchronous>, transform_indices = @transform_4, window_bounds = array<i64: 1, 256>}, {pipeline_mode = #tpu.pipeline_mode<synchronous>, transform_indices = @transform_5, window_bounds = array<i64: 256, 64>}, {pipeline_mode = #tpu.pipeline_mode<synchronous>, transform_indices = @transform_6, window_bounds = array<i64: 1, 64>}, {pipeline_mode = #tpu.pipeline_mode<synchronous>, transform_indices = @transform_7, window_bounds = array<i64: 64, 2>}, {pipeline_mode = #tpu.pipeline_mode<synchronous>, transform_indices = @transform_8, window_bounds = array<i64: 1, 2>}, {transform_indices = @transform_9, window_bounds = array<i64: 8, 2>}]} {
    %c0 = arith.constant 0 : index
    %c0_0 = arith.constant 0 : index
    %0 = vector.load %arg1[%c0, %c0_0] : memref<8x7xf32, #tpu.memory_space<vmem>>, vector<8x7xf32>
    %1 = arith.truncf %0 : vector<8x7xf32> to vector<8x7xbf16>
    %c0_1 = arith.constant 0 : index
    %c0_2 = arith.constant 0 : index
    %2 = vector.load %arg2[%c0_1, %c0_2] : memref<7x512xbf16, #tpu.memory_space<vmem>>, vector<7x512xbf16>
    %cst = arith.constant dense<0.000000e+00> : vector<8x512xf32>
    %3 = tpu.matmul %1, %2, %cst {dimension_numbers = #tpu.dot_dimension_numbers<[1], [0], [0], [1], [0, 0, 1, 1], [], []>} : vector<8x7xbf16>, vector<7x512xbf16>, vector<8x512xf32> -> vector<8x512xf32>
    %c0_3 = arith.constant 0 : index
    %c0_4 = arith.constant 0 : index
    %4 = vector.load %arg3[%c0_3, %c0_4] : memref<1x512xf32, #tpu.memory_space<vmem>>, vector<1x512xf32>
    %5 = vector.broadcast %4 : vector<1x512xf32> to vector<8x512xf32>
    %6 = arith.addf %3, %5 : vector<8x512xf32>
    %cst_5 = arith.constant 0.000000e+00 : f32
    %7 = vector.broadcast %cst_5 : f32 to vector<8x512xf32>
    %8 = arith.maximumf %6, %7 : vector<8x512xf32>
    %9 = arith.truncf %8 : vector<8x512xf32> to vector<8x512xbf16>
    %c0_6 = arith.constant 0 : index
    %c0_7 = arith.constant 0 : index
    %10 = vector.load %arg4[%c0_6, %c0_7] : memref<512x256xbf16, #tpu.memory_space<vmem>>, vector<512x256xbf16>
    %cst_8 = arith.constant dense<0.000000e+00> : vector<8x256xf32>
    %11 = tpu.matmul %9, %10, %cst_8 {dimension_numbers = #tpu.dot_dimension_numbers<[1], [0], [0], [1], [0, 0, 1, 1], [], []>} : vector<8x512xbf16>, vector<512x256xbf16>, vector<8x256xf32> -> vector<8x256xf32>
    %c0_9 = arith.constant 0 : index
    %c0_10 = arith.constant 0 : index
    %12 = vector.load %arg5[%c0_9, %c0_10] : memref<1x256xf32, #tpu.memory_space<vmem>>, vector<1x256xf32>
    %13 = vector.broadcast %12 : vector<1x256xf32> to vector<8x256xf32>
    %14 = arith.addf %11, %13 : vector<8x256xf32>
    %cst_11 = arith.constant 0.000000e+00 : f32
    %15 = vector.broadcast %cst_11 : f32 to vector<8x256xf32>
    %16 = arith.maximumf %14, %15 : vector<8x256xf32>
    %17 = arith.truncf %16 : vector<8x256xf32> to vector<8x256xbf16>
    %c0_12 = arith.constant 0 : index
    %c0_13 = arith.constant 0 : index
    %18 = vector.load %arg6[%c0_12, %c0_13] : memref<256x64xbf16, #tpu.memory_space<vmem>>, vector<256x64xbf16>
    %cst_14 = arith.constant dense<0.000000e+00> : vector<8x64xf32>
    %19 = tpu.matmul %17, %18, %cst_14 {dimension_numbers = #tpu.dot_dimension_numbers<[1], [0], [0], [1], [0, 0, 1, 1], [], []>} : vector<8x256xbf16>, vector<256x64xbf16>, vector<8x64xf32> -> vector<8x64xf32>
    %c0_15 = arith.constant 0 : index
    %c0_16 = arith.constant 0 : index
    %20 = vector.load %arg7[%c0_15, %c0_16] : memref<1x64xf32, #tpu.memory_space<vmem>>, vector<1x64xf32>
    %21 = vector.broadcast %20 : vector<1x64xf32> to vector<8x64xf32>
    %22 = arith.addf %19, %21 : vector<8x64xf32>
    %cst_17 = arith.constant 0.000000e+00 : f32
    %23 = vector.broadcast %cst_17 : f32 to vector<8x64xf32>
    %24 = arith.maximumf %22, %23 : vector<8x64xf32>
    %25 = arith.truncf %24 : vector<8x64xf32> to vector<8x64xbf16>
    %c0_18 = arith.constant 0 : index
    %c0_19 = arith.constant 0 : index
    %26 = vector.load %arg8[%c0_18, %c0_19] : memref<64x2xbf16, #tpu.memory_space<vmem>>, vector<64x2xbf16>
    %cst_20 = arith.constant dense<0.000000e+00> : vector<8x2xf32>
    %27 = tpu.matmul %25, %26, %cst_20 {dimension_numbers = #tpu.dot_dimension_numbers<[1], [0], [0], [1], [0, 0, 1, 1], [], []>} : vector<8x64xbf16>, vector<64x2xbf16>, vector<8x2xf32> -> vector<8x2xf32>
    %c0_21 = arith.constant 0 : index
    %c0_22 = arith.constant 0 : index
    %28 = vector.load %arg9[%c0_21, %c0_22] : memref<1x2xf32, #tpu.memory_space<vmem>>, vector<1x2xf32>
    %29 = vector.broadcast %28 : vector<1x2xf32> to vector<8x2xf32>
    %30 = arith.addf %27, %29 : vector<8x2xf32>
    %31 = tpu.iota {dimensions = array<i32: 1>} : vector<8x2xi32>
    %c1_i32 = arith.constant 1 : i32
    %32 = vector.broadcast %c1_i32 : i32 to vector<8x2xi32>
    %33 = arith.cmpi sge, %31, %32 : vector<8x2xi32>
    %cst_23 = arith.constant -2.000000e+01 : f32
    %cst_24 = arith.constant 2.000000e+00 : f32
    %34 = vector.broadcast %cst_23 : f32 to vector<8x2xf32>
    %35 = arith.maximumf %34, %30 : vector<8x2xf32>
    %36 = vector.broadcast %cst_24 : f32 to vector<8x2xf32>
    %37 = arith.minimumf %36, %35 : vector<8x2xf32>
    %38 = arith.select %33, %37, %30 : vector<8x2xi1>, vector<8x2xf32>
    %c0_25 = arith.constant 0 : index
    %c0_26 = arith.constant 0 : index
    %39 = vector.load %arg10[%c0_25, %c0_26] : memref<8x2xf32, #tpu.memory_space<vmem>>, vector<8x2xf32>
    tpu.vector_store %arg10[%c0_25, %c0_26], %38 {strides = array<i32>} : memref<8x2xf32, #tpu.memory_space<vmem>>, vector<8x2xf32>,
    return
  }
  func.func @transform_0(%arg0: i32) -> (i32, i32) {
    %c0_i32 = arith.constant 0 : i32
    %c0_i32_0 = arith.constant 0 : i32
    return %arg0, %c0_i32 : i32, i32
  }
  func.func @transform_1(%arg0: i32) -> (i32, i32) {
    %c0_i32 = arith.constant 0 : i32
    %c0_i32_0 = arith.constant 0 : i32
    %c0_i32_1 = arith.constant 0 : i32
    return %c0_i32, %c0_i32_0 : i32, i32
  }
  func.func @transform_2(%arg0: i32) -> (i32, i32) {
    %c0_i32 = arith.constant 0 : i32
    %c0_i32_0 = arith.constant 0 : i32
    %c0_i32_1 = arith.constant 0 : i32
    return %c0_i32, %c0_i32_0 : i32, i32
  }
  func.func @transform_3(%arg0: i32) -> (i32, i32) {
    %c0_i32 = arith.constant 0 : i32
    %c0_i32_0 = arith.constant 0 : i32
    %c0_i32_1 = arith.constant 0 : i32
    return %c0_i32, %c0_i32_0 : i32, i32
  }
  func.func @transform_4(%arg0: i32) -> (i32, i32) {
    %c0_i32 = arith.constant 0 : i32
    %c0_i32_0 = arith.constant 0 : i32
    %c0_i32_1 = arith.constant 0 : i32
    return %c0_i32, %c0_i32_0 : i32, i32
  }
  func.func @transform_5(%arg0: i32) -> (i32, i32) {
    %c0_i32 = arith.constant 0 : i32
    %c0_i32_0 = arith.constant 0 : i32
    %c0_i32_1 = arith.constant 0 : i32
    return %c0_i32, %c0_i32_0 : i32, i32
  }
  func.func @transform_6(%arg0: i32) -> (i32, i32) {
    %c0_i32 = arith.constant 0 : i32
    %c0_i32_0 = arith.constant 0 : i32
    %c0_i32_1 = arith.constant 0 : i32
    return %c0_i32, %c0_i32_0 : i32, i32
  }
  func.func @transform_7(%arg0: i32) -> (i32, i32) {
    %c0_i32 = arith.constant 0 : i32
    %c0_i32_0 = arith.constant 0 : i32
    %c0_i32_1 = arith.constant 0 : i32
    return %c0_i32, %c0_i32_0 : i32, i32
  }
  func.func @transform_8(%arg0: i32) -> (i32, i32) {
    %c0_i32 = arith.constant 0 : i32
    %c0_i32_0 = arith.constant 0 : i32
    %c0_i32_1 = arith.constant 0 : i32
    return %c0_i32, %c0_i32_0 : i32, i32
  }
  func.func @transform_9(%arg0: i32) -> (i32, i32) {
    %c0_i32 = arith.constant 0 : i32
    %c0_i32_0 = arith.constant 0 : i32
    return %arg0, %c0_i32 : i32, i32
  }
}

</mosaic_0001>

<llo_original>
// kernel: tpu_custom_call.1
$region0: #{tpu_custom_call.1}
  #allocation0 [shape = 'u32[]', space=smem, size = 0x4, offset = 0x4, fixed_abs, tag = 'smem constant byte address 0x4 - core index']
  #allocation1 [shape = 'u32[144,128]{1,0:T(1,128)}', space=vmem, size = 0x12000, scoped, tag = 'internal scratch']
  %s0 = inlined_call_operand.vmem [shape: f32[8,7], index: 0, kind: input, shape index: {}]
  %s1 = inlined_call_operand.vmem [shape: bf16[7,512], index: 1, kind: input, shape index: {}]
  %s2 = inlined_call_operand.vmem [shape: f32[1,512], index: 2, kind: input, shape index: {}]
  %s3 = inlined_call_operand.hbm [shape: bf16[512,256], index: 3, kind: input, shape index: {}]
  %s4 = inlined_call_operand.vmem [shape: f32[1,256], index: 4, kind: input, shape index: {}]
  %s5 = inlined_call_operand.vmem [shape: bf16[256,64], index: 5, kind: input, shape index: {}]
  %s6 = inlined_call_operand.vmem [shape: f32[1,64], index: 6, kind: input, shape index: {}]
  %s7 = inlined_call_operand.vmem [shape: bf16[64,2], index: 7, kind: input, shape index: {}]
  %s8 = inlined_call_operand.vmem [shape: f32[1,2], index: 8, kind: input, shape index: {}]
  %s9 = inlined_call_operand.vmem [shape: f32[8,2], index: 9, kind: output, shape index: {}]
  %s10 = sld [smem:[#allocation0]]
  $region50: #{tpu_custom_call.1} parent=0
    _
  %s12 = ssub.s32 1, %s10
  %s13 = scalar_select 0, %s12, %s10
  $region1: #{tpu_custom_call.1} parent=0
    #allocation2 [shape = 'u8[262144]{0}', space=vmem, size = 0x40000, scoped, tag = 'input window, operand 3, single buffered']
    #allocation3 [shape = 's32[1]{0}', space=sflag, size = 0x4, scoped, tag = 'scoped memory for tpu_custom_call.1']
    %14 = vsyncpa [#allocation3], 0
    // Predicated region
    $region2: #{tpu_custom_call.1} parent=1 // pred_check
      _
    $region3: #{tpu_custom_call.1} parent=1 // pred_check_branch
      %16 = sbr.rel (0) target = $region5
    $region4: #{tpu_custom_call.1} parent=1 // pred_region
      _
    $region5: #{tpu_custom_call.1} parent=1 // pred_fallthru
      _
    // Predicated region
    $region6: #{tpu_custom_call.1} parent=1 // pred_check
      _
    $region7: #{tpu_custom_call.1} parent=1 // pred_check_branch
      %18 = sbr.rel (0) target = $region9
    $region8: #{tpu_custom_call.1} parent=1 // pred_region
      _
    $region9: #{tpu_custom_call.1} parent=1 // pred_fallthru
      _
    // Predicated region
    $region10: #{tpu_custom_call.1} parent=1 // pred_check
      _
    $region11: #{tpu_custom_call.1} parent=1 // pred_check_branch
      %20 = sbr.rel (0) target = $region13
    $region12: #{tpu_custom_call.1} parent=1 // pred_region
      _
    $region13: #{tpu_custom_call.1} parent=1 // pred_fallthru
      _
    // Predicated region
    $region14: #{tpu_custom_call.1} parent=1 // pred_check
      _
    $region15: #{tpu_custom_call.1} parent=1 // pred_check_branch
      %22 = sbr.rel (0) target = $region17
    $region16: #{tpu_custom_call.1} parent=1 // pred_region
      %s24 = ssub.s32 8192, 8192
      %25 = vsyncadd [#allocation3], %s24
      %s26 = sshll.u32 [#allocation2], 4
      %s27 = int_to_ptr.vmem [resolvable:$true] %s26
      %32 = dma.hbm_to_vmem [thread:$0]  %s3, 8192, %s27, [#allocation3], 128, 128, 8
    $region17: #{tpu_custom_call.1} parent=1 // pred_fallthru
      _
    // Predicated region
    $region18: #{tpu_custom_call.1} parent=1 // pred_check
      _
    $region19: #{tpu_custom_call.1} parent=1 // pred_check_branch
      %34 = sbr.rel (0) target = $region21
    $region20: #{tpu_custom_call.1} parent=1 // pred_region
      _
    $region21: #{tpu_custom_call.1} parent=1 // pred_fallthru
      _
    // Predicated region
    $region22: #{tpu_custom_call.1} parent=1 // pred_check
      _
    $region23: #{tpu_custom_call.1} parent=1 // pred_check_branch
      %36 = sbr.rel (0) target = $region25
    $region24: #{tpu_custom_call.1} parent=1 // pred_region
      _
    $region25: #{tpu_custom_call.1} parent=1 // pred_fallthru
      _
    // Predicated region
    $region26: #{tpu_custom_call.1} parent=1 // pred_check
      _
    $region27: #{tpu_custom_call.1} parent=1 // pred_check_branch
      %38 = sbr.rel (0) target = $region29
    $region28: #{tpu_custom_call.1} parent=1 // pred_region
      _
    $region29: #{tpu_custom_call.1} parent=1 // pred_fallthru
      _
    // Predicated region
    $region30: #{tpu_custom_call.1} parent=1 // pred_check
      _
    $region31: #{tpu_custom_call.1} parent=1 // pred_check_branch
      %40 = sbr.rel (0) target = $region33
    $region32: #{tpu_custom_call.1} parent=1 // pred_region
      _
    $region33: #{tpu_custom_call.1} parent=1 // pred_fallthru
      _
    // Predicated region
    $region34: #{tpu_custom_call.1} parent=1 // pred_check
      _
    $region35: #{tpu_custom_call.1} parent=1 // pred_check_branch
      %42 = sbr.rel (0) target = $region37
    $region36: #{tpu_custom_call.1} parent=1 // pred_region
      _
    $region37: #{tpu_custom_call.1} parent=1 // pred_fallthru
      _
    // Predicated region
    $region38: #{tpu_custom_call.1} parent=1 // pred_check
      _
    $region39: #{tpu_custom_call.1} parent=1 // pred_check_branch
      %44 = sbr.rel (0) target = $region41
    $region40: #{tpu_custom_call.1} parent=1 // pred_region
      %45 = dma.done [#allocation3], 8192
    $region41: #{tpu_custom_call.1} parent=1 // pred_fallthru
      _
    %v47 = vld [vmem:[%s0] sm:$0xff]
    %v48 = vpack.c.bf16 %v47, %v47
    %v49 = vld [vmem:[%s1] sm:$0xff]
    %v50 = vld [vmem:[%s1 + $0x8] sm:$0xff]
    %v51 = vld [vmem:[%s2] sm:$0xf]
    %v53 = vlaneseq
    %v54 = vshrl.u32 %v53, 7
    %v55 = vsub.s32 0, %v54
    %v56 = vrot.slane %v51, %v55
    %v57 = vlaneseq
    %v58 = vshrl.u32 %v57, 7
    %v59 = vsub.s32 1, %v58
    %v60 = vrot.slane %v51, %v59
    %v61 = vlaneseq
    %v62 = vshrl.u32 %v61, 7
    %v63 = vsub.s32 2, %v62
    %v64 = vrot.slane %v51, %v63
    %v65 = vlaneseq
    %v66 = vshrl.u32 %v65, 7
    %v67 = vsub.s32 3, %v66
    %v68 = vrot.slane %v51, %v67
    %v75 = vunpack.c.l.b16 %v49
    %v76 = vunpack.c.h.b16 %v49
    %v77 = vunpack.c.l.b16 %v50
    %v78 = vunpack.c.h.b16 %v50
    %v79 = vpack.c.b16 %v75, %v75
    %v80 = vpack.c.b16 %v76, %v76
    %v81 = vpack.c.b16 %v77, %v77
    %v82 = vpack.c.b16 %v78, %v78
    %vm83 = vcmask 56320
    %v85 = vsel %vm83, %v48, 0
    %vm87 = vcmask 1042432
    %vm88 = vcmask 1043456
    %v89 = vsel %vm87, 4294967295, 65535
    %v90 = vsel %vm88, %v89, 0
    %v92 = vand.u32 %v79, %v90
    %v95 = vand.u32 %v80, %v90
    %v98 = vand.u32 %v81, %v90
    %v101 = vand.u32 %v82, %v90
    %103 = vmatprep.subr.bf16.mxu0 %v95
    %104 = vmatpush1.bf16.msra.mxu0 %v92
    %105 = vmatprep.subr.bf16.mxu0 0
    %106 = vmatpush1.bf16.msra.mxu0 0
    %107 = vmatprep.subr.bf16.mxu0 0
    %108 = vmatpush1.bf16.msra.mxu0 0
    %109 = vmatprep.subr.bf16.mxu0 0
    %110 = vmatpush1.bf16.msra.mxu0 0
    %111 = vmatprep.subr.bf16.mxu0 0
    %112 = vmatpush1.bf16.msra.mxu0 0
    %113 = vmatprep.subr.bf16.mxu0 0
    %114 = vmatpush1.bf16.msra.mxu0 0
    %115 = vmatprep.subr.bf16.mxu0 0
    %116 = vmatpush1.bf16.msra.mxu0 0
    %117 = vmatprep.subr.bf16.mxu0 0
    %118 = vmatpush1.bf16.msra.mxu0 0
    %119 = vmatprep.subr.bf16.mxu0 0
    %120 = vmatpush1.bf16.msra.mxu0 0
    %121 = vmatprep.subr.bf16.mxu0 0
    %122 = vmatpush1.bf16.msra.mxu0 0
    %123 = vmatprep.subr.bf16.mxu0 0
    %124 = vmatpush1.bf16.msra.mxu0 0
    %125 = vmatprep.subr.bf16.mxu0 0
    %126 = vmatpush1.bf16.msra.mxu0 0
    %127 = vmatprep.subr.bf16.mxu0 0
    %128 = vmatpush1.bf16.msra.mxu0 0
    %129 = vmatprep.subr.bf16.mxu0 0
    %130 = vmatpush1.bf16.msra.mxu0 0
    %131 = vmatprep.subr.bf16.mxu0 0
    %132 = vmatpush1.bf16.msra.mxu0 0
    %133 = vmatprep.subr.bf16.mxu0 0
    %134 = vmatpush1.bf16.msra.mxu0 0
    %135 = vmatprep.mubr.bf16.mxu0 0
    %136 = vmatmul.mubr.bf16.gmra.mrb[0].mxu0 %v85
    %v137 = vpop.f32.mrb[0].mxu0
    %v138 = vadd.f32 %v56, %v137
    %v139 = vpop.f32.mrb[0].mxu0
    %v140 = vadd.f32 %v60, %v139
    %v141 = vpop.f32.mrb[0].mxu0
    %v142 = vpop.f32.mrb[0].mxu0
    %143 = vdwg.mxu0
    %144 = vmatprep.subr.bf16.mxu0 %v101
    %145 = vmatpush1.bf16.msra.mxu0 %v98
    %146 = vmatprep.subr.bf16.mxu0 0
    %147 = vmatpush1.bf16.msra.mxu0 0
    %148 = vmatprep.subr.bf16.mxu0 0
    %149 = vmatpush1.bf16.msra.mxu0 0
    %150 = vmatprep.subr.bf16.mxu0 0
    %151 = vmatpush1.bf16.msra.mxu0 0
    %152 = vmatprep.subr.bf16.mxu0 0
    %153 = vmatpush1.bf16.msra.mxu0 0
    %154 = vmatprep.subr.bf16.mxu0 0
    %155 = vmatpush1.bf16.msra.mxu0 0
    %156 = vmatprep.subr.bf16.mxu0 0
    %157 = vmatpush1.bf16.msra.mxu0 0
    %158 = vmatprep.subr.bf16.mxu0 0
    %159 = vmatpush1.bf16.msra.mxu0 0
    %160 = vmatprep.subr.bf16.mxu0 0
    %161 = vmatpush1.bf16.msra.mxu0 0
    %162 = vmatprep.subr.bf16.mxu0 0
    %163 = vmatpush1.bf16.msra.mxu0 0
    %164 = vmatprep.subr.bf16.mxu0 0
    %165 = vmatpush1.bf16.msra.mxu0 0
    %166 = vmatprep.subr.bf16.mxu0 0
    %167 = vmatpush1.bf16.msra.mxu0 0
    %168 = vmatprep.subr.bf16.mxu0 0
    %169 = vmatpush1.bf16.msra.mxu0 0
    %170 = vmatprep.subr.bf16.mxu0 0
    %171 = vmatpush1.bf16.msra.mxu0 0
    %172 = vmatprep.subr.bf16.mxu0 0
    %173 = vmatpush1.bf16.msra.mxu0 0
    %174 = vmatprep.subr.bf16.mxu0 0
    %175 = vmatpush1.bf16.msra.mxu0 0
    %176 = vmatprep.mubr.bf16.mxu0 0
    %177 = vmatmul.mubr.bf16.gmra.mrb[0].mxu0 %v85
    %v178 = vpop.f32.mrb[0].mxu0
    %v179 = vadd.f32 %v64, %v178
    %v180 = vpop.f32.mrb[0].mxu0
    %v181 = vadd.f32 %v68, %v180
    %v182 = vpop.f32.mrb[0].mxu0
    %v183 = vpop.f32.mrb[0].mxu0
    %184 = vdwg.mxu0
    %v185 = vmax.f32 %v138, 0.0
    %v186 = vmax.f32 %v140, 0.0
    %v187 = vmax.f32 %v179, 0.0
    %v188 = vmax.f32 %v181, 0.0
    %v189 = vpack.c.bf16 %v185, %v185
    %v190 = vpack.c.bf16 %v186, %v186
    %v191 = vpack.c.bf16 %v187, %v187
    %v192 = vpack.c.bf16 %v188, %v188
    %v193 = vld [vmem:[#allocation2] sm:$0xff]
    %v194 = vld [vmem:[#allocation2 + $0x8] sm:$0xff]
    %v195 = vld [vmem:[#allocation2 + $0x10] sm:$0xff]
    %v196 = vld [vmem:[#allocation2 + $0x18] sm:$0xff]
    %v197 = vld [vmem:[#allocation2 + $0x20] sm:$0xff]
    %v198 = vld [vmem:[#allocation2 + $0x28] sm:$0xff]
    %v199 = vld [vmem:[#allocation2 + $0x30] sm:$0xff]
    %v200 = vld [vmem:[#allocation2 + $0x38] sm:$0xff]
    %v201 = vld [vmem:[#allocation2 + $0x40] sm:$0xff]
    %v202 = vld [vmem:[#allocation2 + $0x48] sm:$0xff]
    %v203 = vld [vmem:[#allocation2 + $0x50] sm:$0xff]
    %v204 = vld [vmem:[#allocation2 + $0x58] sm:$0xff]
    %v205 = vld [vmem:[#allocation2 + $0x60] sm:$0xff]
    %v206 = vld [vmem:[#allocation2 + $0x68] sm:$0xff]
    %v207 = vld [vmem:[#allocation2 + $0x70] sm:$0xff]
    %v208 = vld [vmem:[#allocation2 + $0x78] sm:$0xff]
    %v209 = vld [vmem:[#allocation2 + $0x80] sm:$0xff]
    %v210 = vld [vmem:[#allocation2 + $0x88] sm:$0xff]
    %v211 = vld [vmem:[#allocation2 + $0x90] sm:$0xff]
    %v212 = vld [vmem:[#allocation2 + $0x98] sm:$0xff]
    %v213 = vld [vmem:[#allocation2 + $0xa0] sm:$0xff]
    %v214 = vld [vmem:[#allocation2 + $0xa8] sm:$0xff]
    %v215 = vld [vmem:[#allocation2 + $0xb0] sm:$0xff]
    %v216 = vld [vmem:[#allocation2 + $0xb8] sm:$0xff]
    %v217 = vld [vmem:[#allocation2 + $0xc0] sm:$0xff]
    %v218 = vld [vmem:[#allocation2 + $0xc8] sm:$0xff]
    %v219 = vld [vmem:[#allocation2 + $0xd0] sm:$0xff]
    %v220 = vld [vmem:[#allocation2 + $0xd8] sm:$0xff]
    %v221 = vld [vmem:[#allocation2 + $0xe0] sm:$0xff]
    %v222 = vld [vmem:[#allocation2 + $0xe8] sm:$0xff]
    %v223 = vld [vmem:[#allocation2 + $0xf0] sm:$0xff]
    %v224 = vld [vmem:[#allocation2 + $0xf8] sm:$0xff]
    %v225 = vld [vmem:[#allocation2 + $0x100] sm:$0xff]
    %v226 = vld [vmem:[#allocation2 + $0x108] sm:$0xff]
    %v227 = vld [vmem:[#allocation2 + $0x110] sm:$0xff]
    %v228 = vld [vmem:[#allocation2 + $0x118] sm:$0xff]
    %v229 = vld [vmem:[#allocation2 + $0x120] sm:$0xff]
    %v230 = vld [vmem:[#allocation2 + $0x128] sm:$0xff]
    %v231 = vld [vmem:[#allocation2 + $0x130] sm:$0xff]
    %v232 = vld [vmem:[#allocation2 + $0x138] sm:$0xff]
    %v233 = vld [vmem:[#allocation2 + $0x140] sm:$0xff]
    %v234 = vld [vmem:[#allocation2 + $0x148] sm:$0xff]
    %v235 = vld [vmem:[#allocation2 + $0x150] sm:$0xff]
    %v236 = vld [vmem:[#allocation2 + $0x158] sm:$0xff]
    %v237 = vld [vmem:[#allocation2 + $0x160] sm:$0xff]
    %v238 = vld [vmem:[#allocation2 + $0x168] sm:$0xff]
    %v239 = vld [vmem:[#allocation2 + $0x170] sm:$0xff]
    %v240 = vld [vmem:[#allocation2 + $0x178] sm:$0xff]
    %v241 = vld [vmem:[#allocation2 + $0x180] sm:$0xff]
    %v242 = vld [vmem:[#allocation2 + $0x188] sm:$0xff]
    %v243 = vld [vmem:[#allocation2 + $0x190] sm:$0xff]
    %v244 = vld [vmem:[#allocation2 + $0x198] sm:$0xff]
    %v245 = vld [vmem:[#allocation2 + $0x1a0] sm:$0xff]
    %v246 = vld [vmem:[#allocation2 + $0x1a8] sm:$0xff]
    %v247 = vld [vmem:[#allocation2 + $0x1b0] sm:$0xff]
    %v248 = vld [vmem:[#allocation2 + $0x1b8] sm:$0xff]
    %v249 = vld [vmem:[#allocation2 + $0x1c0] sm:$0xff]
    %v250 = vld [vmem:[#allocation2 + $0x1c8] sm:$0xff]
    %v251 = vld [vmem:[#allocation2 + $0x1d0] sm:$0xff]
    %v252 = vld [vmem:[#allocation2 + $0x1d8] sm:$0xff]
    %v253 = vld [vmem:[#allocation2 + $0x1e0] sm:$0xff]
    %v254 = vld [vmem:[#allocation2 + $0x1e8] sm:$0xff]
    %v255 = vld [vmem:[#allocation2 + $0x1f0] sm:$0xff]
    %v256 = vld [vmem:[#allocation2 + $0x1f8] sm:$0xff]
    %v257 = vld [vmem:[%s4] sm:$0x3]
    %v259 = vlaneseq
    %v260 = vshrl.u32 %v259, 7
    %v261 = vsub.s32 0, %v260
    %v262 = vrot.slane %v257, %v261
    %v263 = vlaneseq
    %v264 = vshrl.u32 %v263, 7
    %v265 = vsub.s32 1, %v264
    %v266 = vrot.slane %v257, %v265
    %v333 = vunpack.c.l.b16 %v193
    %v334 = vunpack.c.h.b16 %v193
    %v335 = vunpack.c.l.b16 %v194
    %v336 = vunpack.c.h.b16 %v194
    %v337 = vunpack.c.l.b16 %v195
    %v338 = vunpack.c.h.b16 %v195
    %v339 = vunpack.c.l.b16 %v196
    %v340 = vunpack.c.h.b16 %v196
    %v341 = vunpack.c.l.b16 %v197
    %v342 = vunpack.c.h.b16 %v197
    %v343 = vunpack.c.l.b16 %v198
    %v344 = vunpack.c.h.b16 %v198
    %v345 = vunpack.c.l.b16 %v199
    %v346 = vunpack.c.h.b16 %v199
    %v347 = vunpack.c.l.b16 %v200
    %v348 = vunpack.c.h.b16 %v200
    %v349 = vunpack.c.l.b16 %v201
    %v350 = vunpack.c.h.b16 %v201
    %v351 = vunpack.c.l.b16 %v202
    %v352 = vunpack.c.h.b16 %v202
    %v353 = vunpack.c.l.b16 %v203
    %v354 = vunpack.c.h.b16 %v203
    %v355 = vunpack.c.l.b16 %v204
    %v356 = vunpack.c.h.b16 %v204
    %v357 = vunpack.c.l.b16 %v205
    %v358 = vunpack.c.h.b16 %v205
    %v359 = vunpack.c.l.b16 %v206
    %v360 = vunpack.c.h.b16 %v206
    %v361 = vunpack.c.l.b16 %v207
    %v362 = vunpack.c.h.b16 %v207
    %v363 = vunpack.c.l.b16 %v208
    %v364 = vunpack.c.h.b16 %v208
    %v365 = vunpack.c.l.b16 %v209
    %v366 = vunpack.c.h.b16 %v209
    %v367 = vunpack.c.l.b16 %v210
    %v368 = vunpack.c.h.b16 %v210
    %v369 = vunpack.c.l.b16 %v211
    %v370 = vunpack.c.h.b16 %v211
    %v371 = vunpack.c.l.b16 %v212
    %v372 = vunpack.c.h.b16 %v212
    %v373 = vunpack.c.l.b16 %v213
    %v374 = vunpack.c.h.b16 %v213
    %v375 = vunpack.c.l.b16 %v214
    %v376 = vunpack.c.h.b16 %v214
    %v377 = vunpack.c.l.b16 %v215
    %v378 = vunpack.c.h.b16 %v215
    %v379 = vunpack.c.l.b16 %v216
    %v380 = vunpack.c.h.b16 %v216
    %v381 = vunpack.c.l.b16 %v217
    %v382 = vunpack.c.h.b16 %v217
    %v383 = vunpack.c.l.b16 %v218
    %v384 = vunpack.c.h.b16 %v218
    %v385 = vunpack.c.l.b16 %v219
    %v386 = vunpack.c.h.b16 %v219
    %v387 = vunpack.c.l.b16 %v220
    %v388 = vunpack.c.h.b16 %v220
    %v389 = vunpack.c.l.b16 %v221
    %v390 = vunpack.c.h.b16 %v221
    %v391 = vunpack.c.l.b16 %v222
    %v392 = vunpack.c.h.b16 %v222
    %v393 = vunpack.c.l.b16 %v223
    %v394 = vunpack.c.h.b16 %v223
    %v395 = vunpack.c.l.b16 %v224
    %v396 = vunpack.c.h.b16 %v224
    %v397 = vunpack.c.l.b16 %v225
    %v398 = vunpack.c.h.b16 %v225
    %v399 = vunpack.c.l.b16 %v226
    %v400 = vunpack.c.h.b16 %v226
    %v401 = vunpack.c.l.b16 %v227
    %v402 = vunpack.c.h.b16 %v227
    %v403 = vunpack.c.l.b16 %v228
    %v404 = vunpack.c.h.b16 %v228
    %v405 = vunpack.c.l.b16 %v229
    %v406 = vunpack.c.h.b16 %v229
    %v407 = vunpack.c.l.b16 %v230
    %v408 = vunpack.c.h.b16 %v230
    %v409 = vunpack.c.l.b16 %v231
    %v410 = vunpack.c.h.b16 %v231
    %v411 = vunpack.c.l.b16 %v232
    %v412 = vunpack.c.h.b16 %v232
    %v413 = vunpack.c.l.b16 %v233
    %v414 = vunpack.c.h.b16 %v233
    %v415 = vunpack.c.l.b16 %v234
    %v416 = vunpack.c.h.b16 %v234
    %v417 = vunpack.c.l.b16 %v235
    %v418 = vunpack.c.h.b16 %v235
    %v419 = vunpack.c.l.b16 %v236
    %v420 = vunpack.c.h.b16 %v236
    %v421 = vunpack.c.l.b16 %v237
    %v422 = vunpack.c.h.b16 %v237
    %v423 = vunpack.c.l.b16 %v238
    %v424 = vunpack.c.h.b16 %v238
    %v425 = vunpack.c.l.b16 %v239
    %v426 = vunpack.c.h.b16 %v239
    %v427 = vunpack.c.l.b16 %v240
    %v428 = vunpack.c.h.b16 %v240
    %v429 = vunpack.c.l.b16 %v241
    %v430 = vunpack.c.h.b16 %v241
    %v431 = vunpack.c.l.b16 %v242
    %v432 = vunpack.c.h.b16 %v242
    %v433 = vunpack.c.l.b16 %v243
    %v434 = vunpack.c.h.b16 %v243
    %v435 = vunpack.c.l.b16 %v244
    %v436 = vunpack.c.h.b16 %v244
    %v437 = vunpack.c.l.b16 %v245
    %v438 = vunpack.c.h.b16 %v245
    %v439 = vunpack.c.l.b16 %v246
    %v440 = vunpack.c.h.b16 %v246
    %v441 = vunpack.c.l.b16 %v247
    %v442 = vunpack.c.h.b16 %v247
    %v443 = vunpack.c.l.b16 %v248
    %v444 = vunpack.c.h.b16 %v248
    %v445 = vunpack.c.l.b16 %v249
    %v446 = vunpack.c.h.b16 %v249
    %v447 = vunpack.c.l.b16 %v250
    %v448 = vunpack.c.h.b16 %v250
    %v449 = vunpack.c.l.b16 %v251
    %v450 = vunpack.c.h.b16 %v251
    %v451 = vunpack.c.l.b16 %v252
    %v452 = vunpack.c.h.b16 %v252
    %v453 = vunpack.c.l.b16 %v253
    %v454 = vunpack.c.h.b16 %v253
    %v455 = vunpack.c.l.b16 %v254
    %v456 = vunpack.c.h.b16 %v254
    %v457 = vunpack.c.l.b16 %v255
    %v458 = vunpack.c.h.b16 %v255
    %v459 = vunpack.c.l.b16 %v256
    %v460 = vunpack.c.h.b16 %v256
    %v461 = vpack.c.b16 %v335, %v333
    %v462 = vpack.c.b16 %v336, %v334
    %v463 = vpack.c.b16 %v339, %v337
    %v464 = vpack.c.b16 %v340, %v338
    %v465 = vpack.c.b16 %v343, %v341
    %v466 = vpack.c.b16 %v344, %v342
    %v467 = vpack.c.b16 %v347, %v345
    %v468 = vpack.c.b16 %v348, %v346
    %v469 = vpack.c.b16 %v351, %v349
    %v470 = vpack.c.b16 %v352, %v350
    %v471 = vpack.c.b16 %v355, %v353
    %v472 = vpack.c.b16 %v356, %v354
    %v473 = vpack.c.b16 %v359, %v357
    %v474 = vpack.c.b16 %v360, %v358
    %v475 = vpack.c.b16 %v363, %v361
    %v476 = vpack.c.b16 %v364, %v362
    %v477 = vpack.c.b16 %v367, %v365
    %v478 = vpack.c.b16 %v368, %v366
    %v479 = vpack.c.b16 %v371, %v369
    %v480 = vpack.c.b16 %v372, %v370
    %v481 = vpack.c.b16 %v375, %v373
    %v482 = vpack.c.b16 %v376, %v374
    %v483 = vpack.c.b16 %v379, %v377
    %v484 = vpack.c.b16 %v380, %v378
    %v485 = vpack.c.b16 %v383, %v381
    %v486 = vpack.c.b16 %v384, %v382
    %v487 = vpack.c.b16 %v387, %v385
    %v488 = vpack.c.b16 %v388, %v386
    %v489 = vpack.c.b16 %v391, %v389
    %v490 = vpack.c.b16 %v392, %v390
    %v491 = vpack.c.b16 %v395, %v393
    %v492 = vpack.c.b16 %v396, %v394
    %v493 = vpack.c.b16 %v399, %v397
    %v494 = vpack.c.b16 %v400, %v398
    %v495 = vpack.c.b16 %v403, %v401
    %v496 = vpack.c.b16 %v404, %v402
    %v497 = vpack.c.b16 %v407, %v405
    %v498 = vpack.c.b16 %v408, %v406
    %v499 = vpack.c.b16 %v411, %v409
    %v500 = vpack.c.b16 %v412, %v410
    %v501 = vpack.c.b16 %v415, %v413
    %v502 = vpack.c.b16 %v416, %v414
    %v503 = vpack.c.b16 %v419, %v417
    %v504 = vpack.c.b16 %v420, %v418
    %v505 = vpack.c.b16 %v423, %v421
    %v506 = vpack.c.b16 %v424, %v422
    %v507 = vpack.c.b16 %v427, %v425
    %v508 = vpack.c.b16 %v428, %v426
    %v509 = vpack.c.b16 %v431, %v429
    %v510 = vpack.c.b16 %v432, %v430
    %v511 = vpack.c.b16 %v435, %v433
    %v512 = vpack.c.b16 %v436, %v434
    %v513 = vpack.c.b16 %v439, %v437
    %v514 = vpack.c.b16 %v440, %v438
    %v515 = vpack.c.b16 %v443, %v441
    %v516 = vpack.c.b16 %v444, %v442
    %v517 = vpack.c.b16 %v447, %v445
    %v518 = vpack.c.b16 %v448, %v446
    %v519 = vpack.c.b16 %v451, %v449
    %v520 = vpack.c.b16 %v452, %v450
    %v521 = vpack.c.b16 %v455, %v453
    %v522 = vpack.c.b16 %v456, %v454
    %v523 = vpack.c.b16 %v459, %v457
    %v524 = vpack.c.b16 %v460, %v458
    %589 = vmatprep.subr.bf16.mxu0 %v462
    %590 = vmatpush1.bf16.msra.mxu0 %v461
    %591 = vmatprep.subr.bf16.mxu0 %v464
    %592 = vmatpush1.bf16.msra.mxu0 %v463
    %593 = vmatprep.subr.bf16.mxu0 %v466
    %594 = vmatpush1.bf16.msra.mxu0 %v465
    %595 = vmatprep.subr.bf16.mxu0 %v468
    %596 = vmatpush1.bf16.msra.mxu0 %v467
    %597 = vmatprep.subr.bf16.mxu0 %v470
    %598 = vmatpush1.bf16.msra.mxu0 %v469
    %599 = vmatprep.subr.bf16.mxu0 %v472
    %600 = vmatpush1.bf16.msra.mxu0 %v471
    %601 = vmatprep.subr.bf16.mxu0 %v474
    %602 = vmatpush1.bf16.msra.mxu0 %v473
    %603 = vmatprep.subr.bf16.mxu0 %v476
    %604 = vmatpush1.bf16.msra.mxu0 %v475
    %605 = vmatprep.subr.bf16.mxu0 %v478
    %606 = vmatpush1.bf16.msra.mxu0 %v477
    %607 = vmatprep.subr.bf16.mxu0 %v480
    %608 = vmatpush1.bf16.msra.mxu0 %v479
    %609 = vmatprep.subr.bf16.mxu0 %v482
    %610 = vmatpush1.bf16.msra.mxu0 %v481
    %611 = vmatprep.subr.bf16.mxu0 %v484
    %612 = vmatpush1.bf16.msra.mxu0 %v483
    %613 = vmatprep.subr.bf16.mxu0 %v486
    %614 = vmatpush1.bf16.msra.mxu0 %v485
    %615 = vmatprep.subr.bf16.mxu0 %v488
    %616 = vmatpush1.bf16.msra.mxu0 %v487
    %617 = vmatprep.subr.bf16.mxu0 %v490
    %618 = vmatpush1.bf16.msra.mxu0 %v489
    %619 = vmatprep.subr.bf16.mxu0 %v492
    %620 = vmatpush1.bf16.msra.mxu0 %v491
    %621 = vmatprep.mubr.bf16.mxu0 %v190
    %622 = vmatmul.mubr.bf16.gmra.mrb[0].mxu0 %v189
    %v623 = vpop.f32.mrb[0].mxu0
    %v624 = vadd.f32 %v262, %v623
    %v625 = vpop.f32.mrb[0].mxu0
    %v626 = vadd.f32 %v266, %v625
    %v627 = vpop.f32.mrb[0].mxu0
    %v628 = vpop.f32.mrb[0].mxu0
    %629 = vdwg.mxu0
    %630 = vmatprep.subr.bf16.mxu0 %v494
    %631 = vmatpush1.bf16.msra.mxu0 %v493
    %632 = vmatprep.subr.bf16.mxu0 %v496
    %633 = vmatpush1.bf16.msra.mxu0 %v495
    %634 = vmatprep.subr.bf16.mxu0 %v498
    %635 = vmatpush1.bf16.msra.mxu0 %v497
    %636 = vmatprep.subr.bf16.mxu0 %v500
    %637 = vmatpush1.bf16.msra.mxu0 %v499
    %638 = vmatprep.subr.bf16.mxu0 %v502
    %639 = vmatpush1.bf16.msra.mxu0 %v501
    %640 = vmatprep.subr.bf16.mxu0 %v504
    %641 = vmatpush1.bf16.msra.mxu0 %v503
    %642 = vmatprep.subr.bf16.mxu0 %v506
    %643 = vmatpush1.bf16.msra.mxu0 %v505
    %644 = vmatprep.subr.bf16.mxu0 %v508
    %645 = vmatpush1.bf16.msra.mxu0 %v507
    %646 = vmatprep.subr.bf16.mxu0 %v510
    %647 = vmatpush1.bf16.msra.mxu0 %v509
    %648 = vmatprep.subr.bf16.mxu0 %v512
    %649 = vmatpush1.bf16.msra.mxu0 %v511
    %650 = vmatprep.subr.bf16.mxu0 %v514
    %651 = vmatpush1.bf16.msra.mxu0 %v513
    %652 = vmatprep.subr.bf16.mxu0 %v516
    %653 = vmatpush1.bf16.msra.mxu0 %v515
    %654 = vmatprep.subr.bf16.mxu0 %v518
    %655 = vmatpush1.bf16.msra.mxu0 %v517
    %656 = vmatprep.subr.bf16.mxu0 %v520
    %657 = vmatpush1.bf16.msra.mxu0 %v519
    %658 = vmatprep.subr.bf16.mxu0 %v522
    %659 = vmatpush1.bf16.msra.mxu0 %v521
    %660 = vmatprep.subr.bf16.mxu0 %v524
    %661 = vmatpush1.bf16.msra.mxu0 %v523
    %662 = vmatprep.mubr.bf16.mxu0 %v192
    %663 = vmatmul.mubr.bf16.gmra.mrb[0].mxu0 %v191
    %v664 = vpop.f32.mrb[0].mxu0
    %v665 = vadd.f32 %v624, %v664
    %v666 = vpop.f32.mrb[0].mxu0
    %v667 = vadd.f32 %v626, %v666
    %v668 = vpop.f32.mrb[0].mxu0
    %v669 = vpop.f32.mrb[0].mxu0
    %670 = vdwg.mxu0
    %v671 = vmax.f32 %v665, 0.0
    %v672 = vmax.f32 %v667, 0.0
    %v673 = vpack.c.bf16 %v671, %v671
    %v674 = vpack.c.bf16 %v672, %v672
    %v675 = vld [vmem:[%s5] sm:$0xf]
    %v676 = vld [vmem:[%s5 + $0x4] sm:$0xf]
    %v677 = vld [vmem:[%s5 + $0x8] sm:$0xf]
    %v678 = vld [vmem:[%s5 + $0xc] sm:$0xf]
    %v679 = vld [vmem:[%s5 + $0x10] sm:$0xf]
    %v680 = vld [vmem:[%s5 + $0x14] sm:$0xf]
    %v681 = vld [vmem:[%s5 + $0x18] sm:$0xf]
    %v682 = vld [vmem:[%s5 + $0x1c] sm:$0xf]
    %v683 = vld [vmem:[%s5 + $0x20] sm:$0xf]
    %v684 = vld [vmem:[%s5 + $0x24] sm:$0xf]
    %v685 = vld [vmem:[%s5 + $0x28] sm:$0xf]
    %v686 = vld [vmem:[%s5 + $0x2c] sm:$0xf]
    %v687 = vld [vmem:[%s5 + $0x30] sm:$0xf]
    %v688 = vld [vmem:[%s5 + $0x34] sm:$0xf]
    %v689 = vld [vmem:[%s5 + $0x38] sm:$0xf]
    %v690 = vld [vmem:[%s5 + $0x3c] sm:$0xf]
    %v691 = vld [vmem:[%s5 + $0x40] sm:$0xf]
    %v692 = vld [vmem:[%s5 + $0x44] sm:$0xf]
    %v693 = vld [vmem:[%s5 + $0x48] sm:$0xf]
    %v694 = vld [vmem:[%s5 + $0x4c] sm:$0xf]
    %v695 = vld [vmem:[%s5 + $0x50] sm:$0xf]
    %v696 = vld [vmem:[%s5 + $0x54] sm:$0xf]
    %v697 = vld [vmem:[%s5 + $0x58] sm:$0xf]
    %v698 = vld [vmem:[%s5 + $0x5c] sm:$0xf]
    %v699 = vld [vmem:[%s5 + $0x60] sm:$0xf]
    %v700 = vld [vmem:[%s5 + $0x64] sm:$0xf]
    %v701 = vld [vmem:[%s5 + $0x68] sm:$0xf]
    %v702 = vld [vmem:[%s5 + $0x6c] sm:$0xf]
    %v703 = vld [vmem:[%s5 + $0x70] sm:$0xf]
    %v704 = vld [vmem:[%s5 + $0x74] sm:$0xf]
    %v705 = vld [vmem:[%s5 + $0x78] sm:$0xf]
    %v706 = vld [vmem:[%s5 + $0x7c] sm:$0xf]
    %v707 = vld [vmem:[%s6] sm:$0x1]
    %v709 = vlaneseq
    %v710 = vshrl.u32 %v709, 7
    %v711 = vsub.s32 0, %v710
    %v712 = vrot.slane %v707, %v711
    %v746 = vunpack.c.l.b16 %v675
    %v747 = vunpack.c.l.b16 %v676
    %v748 = vunpack.c.l.b16 %v677
    %v749 = vunpack.c.l.b16 %v678
    %v750 = vunpack.c.l.b16 %v679
    %v751 = vunpack.c.l.b16 %v680
    %v752 = vunpack.c.l.b16 %v681
    %v753 = vunpack.c.l.b16 %v682
    %v754 = vunpack.c.l.b16 %v683
    %v755 = vunpack.c.l.b16 %v684
    %v756 = vunpack.c.l.b16 %v685
    %v757 = vunpack.c.l.b16 %v686
    %v758 = vunpack.c.l.b16 %v687
    %v759 = vunpack.c.l.b16 %v688
    %v760 = vunpack.c.l.b16 %v689
    %v761 = vunpack.c.l.b16 %v690
    %v762 = vunpack.c.l.b16 %v691
    %v763 = vunpack.c.l.b16 %v692
    %v764 = vunpack.c.l.b16 %v693
    %v765 = vunpack.c.l.b16 %v694
    %v766 = vunpack.c.l.b16 %v695
    %v767 = vunpack.c.l.b16 %v696
    %v768 = vunpack.c.l.b16 %v697
    %v769 = vunpack.c.l.b16 %v698
    %v770 = vunpack.c.l.b16 %v699
    %v771 = vunpack.c.l.b16 %v700
    %v772 = vunpack.c.l.b16 %v701
    %v773 = vunpack.c.l.b16 %v702
    %v774 = vunpack.c.l.b16 %v703
    %v775 = vunpack.c.l.b16 %v704
    %v776 = vunpack.c.l.b16 %v705
    %v777 = vunpack.c.l.b16 %v706
    %v778 = vpack.c.b16 %v747, %v746
    %v779 = vpack.c.b16 %v749, %v748
    %v780 = vpack.c.b16 %v751, %v750
    %v781 = vpack.c.b16 %v753, %v752
    %v782 = vpack.c.b16 %v755, %v754
    %v783 = vpack.c.b16 %v757, %v756
    %v784 = vpack.c.b16 %v759, %v758
    %v785 = vpack.c.b16 %v761, %v760
    %v786 = vpack.c.b16 %v763, %v762
    %v787 = vpack.c.b16 %v765, %v764
    %v788 = vpack.c.b16 %v767, %v766
    %v789 = vpack.c.b16 %v769, %v768
    %v790 = vpack.c.b16 %v771, %v770
    %v791 = vpack.c.b16 %v773, %v772
    %v792 = vpack.c.b16 %v775, %v774
    %v793 = vpack.c.b16 %v777, %v776
    %810 = vmatprep.subr.bf16.mxu0 0
    %811 = vmatpush1.bf16.msra.mxu0 %v778
    %812 = vmatprep.subr.bf16.mxu0 0
    %813 = vmatpush1.bf16.msra.mxu0 %v779
    %814 = vmatprep.subr.bf16.mxu0 0
    %815 = vmatpush1.bf16.msra.mxu0 %v780
    %816 = vmatprep.subr.bf16.mxu0 0
    %817 = vmatpush1.bf16.msra.mxu0 %v781
    %818 = vmatprep.subr.bf16.mxu0 0
    %819 = vmatpush1.bf16.msra.mxu0 %v782
    %820 = vmatprep.subr.bf16.mxu0 0
    %821 = vmatpush1.bf16.msra.mxu0 %v783
    %822 = vmatprep.subr.bf16.mxu0 0
    %823 = vmatpush1.bf16.msra.mxu0 %v784
    %824 = vmatprep.subr.bf16.mxu0 0
    %825 = vmatpush1.bf16.msra.mxu0 %v785
    %826 = vmatprep.subr.bf16.mxu0 0
    %827 = vmatpush1.bf16.msra.mxu0 %v786
    %828 = vmatprep.subr.bf16.mxu0 0
    %829 = vmatpush1.bf16.msra.mxu0 %v787
    %830 = vmatprep.subr.bf16.mxu0 0
    %831 = vmatpush1.bf16.msra.mxu0 %v788
    %832 = vmatprep.subr.bf16.mxu0 0
    %833 = vmatpush1.bf16.msra.mxu0 %v789
    %834 = vmatprep.subr.bf16.mxu0 0
    %835 = vmatpush1.bf16.msra.mxu0 %v790
    %836 = vmatprep.subr.bf16.mxu0 0
    %837 = vmatpush1.bf16.msra.mxu0 %v791
    %838 = vmatprep.subr.bf16.mxu0 0
    %839 = vmatpush1.bf16.msra.mxu0 %v792
    %840 = vmatprep.subr.bf16.mxu0 0
    %841 = vmatpush1.bf16.msra.mxu0 %v793
    %842 = vmatprep.mubr.bf16.mxu0 %v674
    %843 = vmatmul.mubr.bf16.gmra.mrb[0].mxu0 %v673
    %v844 = vpop.f32.mrb[0].mxu0
    %v845 = vadd.f32 %v712, %v844
    %v846 = vpop.f32.mrb[0].mxu0
    %v847 = vpop.f32.mrb[0].mxu0
    %v848 = vpop.f32.mrb[0].mxu0
    %849 = vdwg.mxu0
    %v850 = vmax.f32 %v845, 0.0
    %v851 = vpack.c.bf16 %v850, %v850
    %v852 = vld [vmem:[%s7] sm:$0xf]
    %v853 = vld [vmem:[%s7 + $0x4] sm:$0xf]
    %v854 = vld [vmem:[%s7 + $0x8] sm:$0xf]
    %v855 = vld [vmem:[%s7 + $0xc] sm:$0xf]
    %v856 = vld [vmem:[%s7 + $0x10] sm:$0xf]
    %v857 = vld [vmem:[%s7 + $0x14] sm:$0xf]
    %v858 = vld [vmem:[%s7 + $0x18] sm:$0xf]
    %v859 = vld [vmem:[%s7 + $0x1c] sm:$0xf]
    %v860 = vld [vmem:[%s8] sm:$0x1]
    %v862 = vlaneseq
    %v863 = vshrl.u32 %v862, 7
    %v864 = vsub.s32 0, %v863
    %v865 = vrot.slane %v860, %v864
    %v875 = vunpack.c.l.b16 %v852
    %v876 = vunpack.c.l.b16 %v853
    %v877 = vunpack.c.l.b16 %v854
    %v878 = vunpack.c.l.b16 %v855
    %v879 = vunpack.c.l.b16 %v856
    %v880 = vunpack.c.l.b16 %v857
    %v881 = vunpack.c.l.b16 %v858
    %v882 = vunpack.c.l.b16 %v859
    %v883 = vpack.c.b16 %v876, %v875
    %v884 = vpack.c.b16 %v878, %v877
    %v885 = vpack.c.b16 %v880, %v879
    %v886 = vpack.c.b16 %v882, %v881
    %vm891 = vcmask 523264
    %v893 = vsel %vm891, %v851, 0
    %895 = vmatprep.subr.bf16.mxu0 0
    %896 = vmatpush1.bf16.msra.mxu0 %v883
    %897 = vmatprep.subr.bf16.mxu0 0
    %898 = vmatpush1.bf16.msra.mxu0 %v884
    %899 = vmatprep.subr.bf16.mxu0 0
    %900 = vmatpush1.bf16.msra.mxu0 %v885
    %901 = vmatprep.subr.bf16.mxu0 0
    %902 = vmatpush1.bf16.msra.mxu0 %v886
    %903 = vmatprep.subr.bf16.mxu0 0
    %904 = vmatpush1.bf16.msra.mxu0 0
    %905 = vmatprep.subr.bf16.mxu0 0
    %906 = vmatpush1.bf16.msra.mxu0 0
    %907 = vmatprep.subr.bf16.mxu0 0
    %908 = vmatpush1.bf16.msra.mxu0 0
    %909 = vmatprep.subr.bf16.mxu0 0
    %910 = vmatpush1.bf16.msra.mxu0 0
    %911 = vmatprep.subr.bf16.mxu0 0
    %912 = vmatpush1.bf16.msra.mxu0 0
    %913 = vmatprep.subr.bf16.mxu0 0
    %914 = vmatpush1.bf16.msra.mxu0 0
    %915 = vmatprep.subr.bf16.mxu0 0
    %916 = vmatpush1.bf16.msra.mxu0 0
    %917 = vmatprep.subr.bf16.mxu0 0
    %918 = vmatpush1.bf16.msra.mxu0 0
    %919 = vmatprep.subr.bf16.mxu0 0
    %920 = vmatpush1.bf16.msra.mxu0 0
    %921 = vmatprep.subr.bf16.mxu0 0
    %922 = vmatpush1.bf16.msra.mxu0 0
    %923 = vmatprep.subr.bf16.mxu0 0
    %924 = vmatpush1.bf16.msra.mxu0 0
    %925 = vmatprep.subr.bf16.mxu0 0
    %926 = vmatpush1.bf16.msra.mxu0 0
    %927 = vmatprep.mubr.bf16.mxu0 0
    %928 = vmatmul.mubr.bf16.gmra.mrb[0].mxu0 %v893
    %v929 = vpop.f32.mrb[0].mxu0
    %v930 = vadd.f32 %v865, %v929
    %v931 = vpop.f32.mrb[0].mxu0
    %v932 = vpop.f32.mrb[0].mxu0
    %v933 = vpop.f32.mrb[0].mxu0
    %934 = vdwg.mxu0
    %v935 = vlaneseq
    %v936 = vand.u32 %v935, 127
    %vm937 = vcmp.ge.s32.totalorder %v936, 1
    %v938 = vmax.f32 %v930, -20.0
    %v939 = vmin.f32 %v938, 2.0
    %v940 = vsel %vm937, %v939, %v930
    %vm941 = vcmask 15360
    %942 = vst.msk [vmem:[%s9] sm:$0xff] %vm941, %v940
    // Predicated region
    $region42: #{tpu_custom_call.1} parent=1 // pred_check
      _
    $region43: #{tpu_custom_call.1} parent=1 // pred_check_branch
      %944 = sbr.rel (0) target = $region45
    $region44: #{tpu_custom_call.1} parent=1 // pred_region
      _
    $region45: #{tpu_custom_call.1} parent=1 // pred_fallthru
      _
    // Predicated region
    $region46: #{tpu_custom_call.1} parent=1 // pred_check
      _
    $region47: #{tpu_custom_call.1} parent=1 // pred_check_branch
      %946 = sbr.rel (0) target = $region49
    $region48: #{tpu_custom_call.1} parent=1 // pred_region
      _
    $region49: #{tpu_custom_call.1} parent=1 // pred_fallthru
      _
    %947 = vsyncpa [#allocation3], 1

</llo_original>
